<compile_context>
chip_gen: v6e
topology: v6e:2x2x1
jax: 0.10.0
libtpu: 0.0.40
codegen_flags: <defaults>
</compile_context>

<pallas_src>
import functools
import math

import jax
import jax.numpy as jnp
from jax.experimental import pallas as pl
from jax.experimental.pallas import tpu as pltpu

_INV_SQRT2 = 1.0 / math.sqrt(2.0)
_MiB = 1024 * 1024


def _ffn_kernel(x_ref, w1_ref, b1_ref, w2_ref, b2_ref, o_ref, acc_ref, *,
                approximate_gelu):
    # x_ref: (tm, H)  w1_ref: (ti, H)  b1_ref: (1, ti)
    # w2_ref: (H, ti) b2_ref: (1, H)   o_ref: (tm, H)  acc_ref: (tm, H) f32
    j = pl.program_id(1)

    @pl.when(j == 0)
    def _():
        acc_ref[...] = jnp.zeros_like(acc_ref)

    x = x_ref[...]
    # fc1 partial for this I tile: (tm, H) . (ti, H)^T -> (tm, ti), f32 accum.
    # Contraction on dim 1 of both operands == x @ W1^T (nn.Linear form);
    # Mosaic lowers this on the MXU's transposed-RHS path (no XLU vxpose).
    h = jax.lax.dot_general(
        x, w1_ref[...],
        dimension_numbers=(((1,), (1,)), ((), ())),
        preferred_element_type=jnp.float32,
    )
    h = h + b1_ref[...].astype(jnp.float32)

    if approximate_gelu:
        # tanh-based GELU -> EUP slot (nearly free under the matmuls).
        h = jax.nn.gelu(h, approximate=True)
    else:
        # Exact GELU: matches PyTorch nn.GELU() default.
        h = 0.5 * h * (1.0 + jax.lax.erf(h * _INV_SQRT2))

    # fc2 partial: (tm, ti) . (H, ti)^T -> (tm, H). Feed the MXU in weight
    # dtype (bf16 fast path when the model is bf16; no-op for f32).
    h = h.astype(w2_ref.dtype)
    acc_ref[...] += jax.lax.dot_general(
        h, w2_ref[...],
        dimension_numbers=(((1,), (1,)), ((), ())),
        preferred_element_type=jnp.float32,
    )

    @pl.when(j == pl.num_programs(1) - 1)
    def _():
        o_ref[...] = (acc_ref[...]
                      + b2_ref[...].astype(jnp.float32)).astype(o_ref.dtype)


def _vmem_capacity_bytes():
    try:
        return int(pltpu.get_tpu_info().vmem_capacity_bytes)
    except Exception:  # pragma: no cover - conservative default (128 MiB parts)
        return 128 * _MiB


def _block_spec(shape, index_map, buffer_count=None):
    """BlockSpec with an optional pipeline buffer-count hint (best effort)."""
    if buffer_count is not None:
        try:
            return pl.BlockSpec(shape, index_map,
                                pipeline_mode=pl.Buffered(buffer_count))
        except TypeError:  # API variant without pipeline_mode -> default specs
            pass
    return pl.BlockSpec(shape, index_map)


def _pick_tiles(M, H, I, itemsize, budget, row_tile, inter_tile, small_vmem):
    """Choose (row tile, intermediate tile) under an explicit VMEM budget."""
    # Sublane packing: 8 rows for f32, 16 for bf16, 32 for int8/fp8.
    sub = max(8, 32 // itemsize)

    if row_tile is not None:
        assert row_tile == M or row_tile % sub == 0, (
            f"row_tile must equal M or be a multiple of {sub} for this dtype")
    if inter_tile is not None:
        assert I % inter_tile == 0 and (inter_tile == I or inter_tile % 128 == 0), (
            "inter_tile must divide I and be a multiple of 128 (or equal I)")

    # Intermediate-tile candidates: must divide I exactly (reduction axis --
    # no padded garbage may reach the accumulator) and keep the (1, ti) bias
    # block lane-legal (multiple of 128, or the full I extent).
    cands = sorted({I, *[c for c in range(128, I, 128) if I % c == 0]},
                   reverse=True)

    def vmem_est(tm, ti, w_db):
        io = 2 * (2 * tm * H * itemsize)               # x + out, double-buffered
        w = w_db * (2 * ti * H + ti) * itemsize         # W1 + W2 + b1 tiles
        b2b = H * itemsize                              # b2 (tiny, resident)
        acc = tm * H * 4                                # f32 accumulator scratch
        hbuf = tm * ti * 4                              # f32 intermediate tile
        return io + w + b2b + acc + hbuf

    def cap_tm(cap):
        if M <= cap:
            return M
        return max(sub, (cap // sub) * sub)

    # 1) Prefer full weight residency (ti == I, single-buffered weights):
    #    removes all per-row-tile weight re-streaming from HBM.
    tm = row_tile if row_tile is not None else cap_tm(256)
    if (inter_tile is None or inter_tile == I) and vmem_est(tm, I, 1) <= budget:
        ti = I
    else:
        # 2) Streamed weights: raise the row tile so arithmetic intensity
        #    (~tm flops per byte of weight traffic) clears the HBM roofline,
        #    then pick the largest ti that fits; shrink tm if even the
        #    smallest ti overshoots the budget.
        tm_target = 512 if small_vmem else 1024
        tm = row_tile if row_tile is not None else cap_tm(tm_target)
        pool = [inter_tile] if inter_tile is not None else cands
        ti = None
        while True:
            for c in pool:
                if vmem_est(tm, c, 2) <= budget:
                    ti = c
                    break
            if ti is not None or row_tile is not None or tm <= sub:
                break
            tm = max(sub, ((tm // 2) // sub) * sub)
        if ti is None:
            ti = pool[-1]  # best effort; vmem_limit below is still capped

    # 3) v7x has 2 TensorCores: ensure >= 2 row tiles so the "parallel" row
    #    axis can shard across both cores, even for small M.
    if small_vmem and row_tile is None and M > sub and pl.cdiv(M, tm) == 1:
        tm = max(sub, ((pl.cdiv(M, 2) + sub - 1) // sub) * sub)

    resident = (ti == I)
    return tm, ti, resident, vmem_est(tm, ti, 1 if resident else 2)


def feed_forward_network(x, w1, b1, w2, b2, *, row_tile=None, inter_tile=None,
                         vmem_budget_bytes=None, approximate_gelu=False):
    """Eval-mode FFN: fc2(GELU(fc1(x))).  Dropout is identity in eval mode.

    x:  [B, S, H]
    w1: [I, H], b1: [I]   (PyTorch nn.Linear layout -- used as stored)
    w2: [H, I], b2: [H]
    """
    B, S, H = x.shape
    I, H1 = w1.shape
    assert H1 == H and w2.shape == (H, I) and b1.shape == (I,) and b2.shape == (H,)
    M = B * S

    x2 = x.reshape(M, H)
    b1_2d = b1.reshape(1, I)
    b2_2d = b2.reshape(1, H)

    itemsize = jnp.dtype(x.dtype).itemsize

    # Generation-aware VMEM budget / limit.
    vmem_cap = _vmem_capacity_bytes()
    small_vmem = vmem_cap <= 96 * _MiB              # v7x-class (64 MiB per TC)
    if vmem_budget_bytes is None:
        if small_vmem:
            vmem_budget_bytes = max(16 * _MiB, min(52 * _MiB, vmem_cap - 12 * _MiB))
        else:
            vmem_budget_bytes = 100 * _MiB          # 128 MiB parts (v5e/v6e)
    limit_cap = max(32 * _MiB,
                    (vmem_cap - 8 * _MiB) if small_vmem else 110 * _MiB)

    tm, ti, weights_resident, vmem_est = _pick_tiles(
        M, H, I, itemsize, vmem_budget_bytes, row_tile, inter_tile, small_vmem)

    n_row_tiles = pl.cdiv(M, tm)
    n_inter_tiles = I // ti                         # ti divides I by construction
    grid = (n_row_tiles, n_inter_tiles)

    # Real HBM traffic: weights are re-read once per row tile when streamed.
    w_bytes = (2 * I * H + I) * itemsize
    cost = pl.CostEstimate(
        flops=4 * M * H * I,                        # two matmuls
        transcendentals=M * I,                      # erf / tanh
        bytes_accessed=(2 * M * H + H) * itemsize
        + (w_bytes if weights_resident else n_row_tiles * w_bytes),
    )

    kernel = functools.partial(_ffn_kernel, approximate_gelu=approximate_gelu)
    out_shape = jax.ShapeDtypeStruct((M, H), x.dtype)
    vmem_limit = int(min(limit_cap, max(32 * _MiB, vmem_est + 8 * _MiB)))

    # Serpentine over the reduction axis: on odd row tiles walk the weight
    # tiles backwards, so the boundary tile is reused (one weight-tile DMA
    # saved per row tile when weights are streamed).
    if n_inter_tiles > 1:
        def wj(i, j):
            odd = i % 2
            return j + odd * (n_inter_tiles - 1 - 2 * j)
    else:
        def wj(i, j):
            return 0

    def run(use_buffer_hints):
        w_bc = 1 if (use_buffer_hints and weights_resident) else None
        b2_bc = 1 if use_buffer_hints else None
        in_specs = [
            _block_spec((tm, H), lambda i, j: (i, 0)),               # x row tile
            _block_spec((ti, H), lambda i, j: (wj(i, j), 0), w_bc),  # W1 (PyTorch layout)
            _block_spec((1, ti), lambda i, j: (0, wj(i, j)), w_bc),  # b1 tile
            _block_spec((H, ti), lambda i, j: (0, wj(i, j)), w_bc),  # W2 (PyTorch layout)
            _block_spec((1, H), lambda i, j: (0, 0), b2_bc),         # b2 (resident)
        ]
        return pl.pallas_call(
            kernel,
            out_shape=out_shape,
            grid_spec=pltpu.PrefetchScalarGridSpec(
                num_scalar_prefetch=0,
                grid=grid,
                in_specs=in_specs,
                out_specs=pl.BlockSpec((tm, H), lambda i, j: (i, 0)),
                scratch_shapes=[pltpu.VMEM((tm, H), jnp.float32)],
            ),
            compiler_params=pltpu.CompilerParams(
                dimension_semantics=("parallel", "arbitrary"),
                vmem_limit_bytes=vmem_limit,
            ),
            cost_estimate=cost,
        )(x2, w1, b1_2d, w2, b2_2d)

    try:
        out = run(True)
    except Exception:
        # pl.Buffered(1) hint rejected on this jax/Mosaic version -> rerun
        # with default (double-buffered) block specs.
        out = run(False)

    return out.reshape(B, S, H)


def _reference_ffn(x, w1, b1, w2, b2, approximate=False):
    h = jnp.einsum("bsh,ih->bsi", x, w1) + b1
    h = jax.nn.gelu(h, approximate=approximate)
    y = jnp.einsum("bsi,hi->bsh", h, w2) + b2
    return y


if __name__ == "__main__":
    # Small demo shapes. NOTE: H=32 < 128 means masked partial stores on the
    # toy case; production shapes (H, I multiples of 128) get lane-dense tiles.
    batch, seq, hidden, inter = 2, 8, 32, 64

    key = jax.random.PRNGKey(0)
    kx, k1, kb1, k2, kb2 = jax.random.split(key, 5)

    x = jax.random.normal(kx, (batch, seq, hidden), dtype=jnp.float32)

    # Deterministic init mimicking nn.Linear's uniform(-1/sqrt(fan_in), 1/sqrt(fan_in)).
    lim1 = 1.0 / math.sqrt(hidden)
    w1 = jax.random.uniform(k1, (inter, hidden), jnp.float32, -lim1, lim1)
    b1 = jax.random.uniform(kb1, (inter,), jnp.float32, -lim1, lim1)
    lim2 = 1.0 / math.sqrt(inter)
    w2 = jax.random.uniform(k2, (hidden, inter), jnp.float32, -lim2, lim2)
    b2 = jax.random.uniform(kb2, (hidden,), jnp.float32, -lim2, lim2)

    # Exact-GELU path (matches PyTorch nn.GELU() default).
    out = jax.block_until_ready(feed_forward_network(x, w1, b1, w2, b2))
    ref = _reference_ffn(x, w1, b1, w2, b2, approximate=False)
    assert out.shape == (batch, seq, hidden)
    assert jnp.allclose(out, ref, atol=1e-5, rtol=1e-5), "exact-GELU mismatch"

    # Tanh-approx GELU path (EUP-slot variant suggested for v6e/v7x).
    out_a = jax.block_until_ready(
        feed_forward_network(x, w1, b1, w2, b2, approximate_gelu=True))
    ref_a = _reference_ffn(x, w1, b1, w2, b2, approximate=True)
    assert jnp.allclose(out_a, ref_a, atol=1e-4, rtol=1e-4), "approx-GELU mismatch"

    # Lane-dense bf16 check (128-wide hidden, resident weights, bf16 MXU path).
    bh, bi, bs = 128, 256, 64
    kx2, k3, kb3, k4, kb4 = jax.random.split(jax.random.PRNGKey(1), 5)
    xb = jax.random.normal(kx2, (batch, bs, bh), jnp.float32).astype(jnp.bfloat16)
    l1 = 1.0 / math.sqrt(bh)
    w1b = jax.random.uniform(k3, (bi, bh), jnp.float32, -l1, l1).astype(jnp.bfloat16)
    b1b = jax.random.uniform(kb3, (bi,), jnp.float32, -l1, l1).astype(jnp.bfloat16)
    l2 = 1.0 / math.sqrt(bi)
    w2b = jax.random.uniform(k4, (bh, bi), jnp.float32, -l2, l2).astype(jnp.bfloat16)
    b2b = jax.random.uniform(kb4, (bh,), jnp.float32, -l2, l2).astype(jnp.bfloat16)

    out_b = jax.block_until_ready(feed_forward_network(xb, w1b, b1b, w2b, b2b))
    ref_b = _reference_ffn(xb.astype(jnp.float32), w1b.astype(jnp.float32),
                           b1b.astype(jnp.float32), w2b.astype(jnp.float32),
                           b2b.astype(jnp.float32), approximate=False)
    max_err = jnp.max(jnp.abs(out_b.astype(jnp.float32) - ref_b))
    assert out_b.dtype == jnp.bfloat16 and max_err < 0.1, f"bf16 mismatch: {max_err}"

    print("KERNEL_OK")
</pallas_src>

<mosaic_0001>
module attributes {stable_mosaic.version = 11 : i64} {
  func.func @_ffn_kernel(%arg0: i32, %arg1: i32, %arg2: memref<16x32xf32, #tpu.memory_space<vmem>>, %arg3: memref<64x32xf32, #tpu.memory_space<vmem>>, %arg4: memref<1x64xf32, #tpu.memory_space<vmem>>, %arg5: memref<32x64xf32, #tpu.memory_space<vmem>>, %arg6: memref<1x32xf32, #tpu.memory_space<vmem>>, %arg7: memref<16x32xf32, #tpu.memory_space<vmem>>, %arg8: memref<16x32xf32, #tpu.memory_space<vmem>>) attributes {dimension_semantics = [#tpu.dimension_semantics<parallel>, #tpu.dimension_semantics<arbitrary>], iteration_bounds = array<i64: 1, 1>, scalar_prefetch = 0 : i64, scratch_operands = 1 : i64, tpu.core_type = #tpu.core_type<tc>, window_params = [{transform_indices = @transform_0, window_bounds = array<i64: 16, 32>}, {pipeline_mode = #tpu.pipeline_mode<synchronous>, transform_indices = @transform_1, window_bounds = array<i64: 64, 32>}, {pipeline_mode = #tpu.pipeline_mode<synchronous>, transform_indices = @transform_2, window_bounds = array<i64: 1, 64>}, {pipeline_mode = #tpu.pipeline_mode<synchronous>, transform_indices = @transform_3, window_bounds = array<i64: 32, 64>}, {pipeline_mode = #tpu.pipeline_mode<synchronous>, transform_indices = @transform_4, window_bounds = array<i64: 1, 32>}, {transform_indices = @transform_5, window_bounds = array<i64: 16, 32>}]} {
    %c0_i32 = arith.constant 0 : i32
    %0 = arith.cmpi eq, %arg1, %c0_i32 : i32
    %1 = arith.extui %0 : i1 to i32
    %c0_i32_0 = arith.constant 0 : i32
    %2 = arith.cmpi ne, %1, %c0_i32_0 : i32
    scf.if %2 {
      %cst_18 = arith.constant 0.000000e+00 : f32
      %25 = vector.broadcast %cst_18 : f32 to vector<16x32xf32>
      %c0_19 = arith.constant 0 : index
      %c0_20 = arith.constant 0 : index
      %26 = vector.load %arg8[%c0_19, %c0_20] : memref<16x32xf32, #tpu.memory_space<vmem>>, vector<16x32xf32>
      tpu.vector_store %arg8[%c0_19, %c0_20], %25 {strides = array<i32>} : memref<16x32xf32, #tpu.memory_space<vmem>>, vector<16x32xf32>,
    } else {
    }
    %c0 = arith.constant 0 : index
    %c0_1 = arith.constant 0 : index
    %3 = vector.load %arg2[%c0, %c0_1] : memref<16x32xf32, #tpu.memory_space<vmem>>, vector<16x32xf32>
    %c0_2 = arith.constant 0 : index
    %c0_3 = arith.constant 0 : index
    %4 = vector.load %arg3[%c0_2, %c0_3] : memref<64x32xf32, #tpu.memory_space<vmem>>, vector<64x32xf32>
    %cst = arith.constant dense<0.000000e+00> : vector<16x64xf32>
    %5 = tpu.matmul %3, %4, %cst {dimension_numbers = #tpu.dot_dimension_numbers<[1], [1], [0], [0], [0, 0, 1, 0], [], []>} : vector<16x32xf32>, vector<64x32xf32>, vector<16x64xf32> -> vector<16x64xf32>
    %c0_4 = arith.constant 0 : index
    %c0_5 = arith.constant 0 : index
    %6 = vector.load %arg4[%c0_4, %c0_5] : memref<1x64xf32, #tpu.memory_space<vmem>>, vector<1x64xf32>
    %7 = vector.broadcast %6 : vector<1x64xf32> to vector<16x64xf32>
    %8 = arith.addf %5, %7 : vector<16x64xf32>
    %cst_6 = arith.constant 5.000000e-01 : f32
    %9 = vector.broadcast %cst_6 : f32 to vector<16x64xf32>
    %10 = arith.mulf %9, %8 : vector<16x64xf32>
    %cst_7 = arith.constant 0.707106769 : f32
    %11 = vector.broadcast %cst_7 : f32 to vector<16x64xf32>
    %12 = arith.mulf %8, %11 : vector<16x64xf32>
    %13 = math.erf %12 : vector<16x64xf32>
    %cst_8 = arith.constant 1.000000e+00 : f32
    %14 = vector.broadcast %cst_8 : f32 to vector<16x64xf32>
    %15 = arith.addf %14, %13 : vector<16x64xf32>
    %16 = arith.mulf %10, %15 : vector<16x64xf32>
    %c0_9 = arith.constant 0 : index
    %c0_10 = arith.constant 0 : index
    %17 = vector.load %arg8[%c0_9, %c0_10] : memref<16x32xf32, #tpu.memory_space<vmem>>, vector<16x32xf32>
    %c0_11 = arith.constant 0 : index
    %c0_12 = arith.constant 0 : index
    %18 = vector.load %arg5[%c0_11, %c0_12] : memref<32x64xf32, #tpu.memory_space<vmem>>, vector<32x64xf32>
    %cst_13 = arith.constant dense<0.000000e+00> : vector<16x32xf32>
    %19 = tpu.matmul %16, %18, %cst_13 {dimension_numbers = #tpu.dot_dimension_numbers<[1], [1], [0], [0], [0, 0, 1, 0], [], []>} : vector<16x64xf32>, vector<32x64xf32>, vector<16x32xf32> -> vector<16x32xf32>
    %20 = arith.addf %17, %19 : vector<16x32xf32>
    %c0_14 = arith.constant 0 : index
    %c0_15 = arith.constant 0 : index
    %21 = vector.load %arg8[%c0_14, %c0_15] : memref<16x32xf32, #tpu.memory_space<vmem>>, vector<16x32xf32>
    tpu.vector_store %arg8[%c0_14, %c0_15], %20 {strides = array<i32>} : memref<16x32xf32, #tpu.memory_space<vmem>>, vector<16x32xf32>,
    %c0_i32_16 = arith.constant 0 : i32
    %22 = arith.cmpi eq, %arg1, %c0_i32_16 : i32
    %23 = arith.extui %22 : i1 to i32
    %c0_i32_17 = arith.constant 0 : i32
    %24 = arith.cmpi ne, %23, %c0_i32_17 : i32
    scf.if %24 {
      %c0_18 = arith.constant 0 : index
      %c0_19 = arith.constant 0 : index
      %25 = vector.load %arg8[%c0_18, %c0_19] : memref<16x32xf32, #tpu.memory_space<vmem>>, vector<16x32xf32>
      %c0_20 = arith.constant 0 : index
      %c0_21 = arith.constant 0 : index
      %26 = vector.load %arg6[%c0_20, %c0_21] : memref<1x32xf32, #tpu.memory_space<vmem>>, vector<1x32xf32>
      %27 = vector.broadcast %26 : vector<1x32xf32> to vector<16x32xf32>
      %28 = arith.addf %25, %27 : vector<16x32xf32>
      %c0_22 = arith.constant 0 : index
      %c0_23 = arith.constant 0 : index
      %29 = vector.load %arg7[%c0_22, %c0_23] : memref<16x32xf32, #tpu.memory_space<vmem>>, vector<16x32xf32>
      tpu.vector_store %arg7[%c0_22, %c0_23], %28 {strides = array<i32>} : memref<16x32xf32, #tpu.memory_space<vmem>>, vector<16x32xf32>,
    } else {
    }
    return
  }
  func.func @transform_0(%arg0: i32, %arg1: i32) -> (i32, i32) {
    %c0_i32 = arith.constant 0 : i32
    %c0_i32_0 = arith.constant 0 : i32
    return %arg0, %c0_i32 : i32, i32
  }
  func.func @transform_1(%arg0: i32, %arg1: i32) -> (i32, i32) {
    %c0_i32 = arith.constant 0 : i32
    %c0_i32_0 = arith.constant 0 : i32
    %c0_i32_1 = arith.constant 0 : i32
    return %c0_i32, %c0_i32_0 : i32, i32
  }
  func.func @transform_2(%arg0: i32, %arg1: i32) -> (i32, i32) {
    %c0_i32 = arith.constant 0 : i32
    %c0_i32_0 = arith.constant 0 : i32
    %c0_i32_1 = arith.constant 0 : i32
    return %c0_i32, %c0_i32_0 : i32, i32
  }
  func.func @transform_3(%arg0: i32, %arg1: i32) -> (i32, i32) {
    %c0_i32 = arith.constant 0 : i32
    %c0_i32_0 = arith.constant 0 : i32
    %c0_i32_1 = arith.constant 0 : i32
    return %c0_i32, %c0_i32_0 : i32, i32
  }
  func.func @transform_4(%arg0: i32, %arg1: i32) -> (i32, i32) {
    %c0_i32 = arith.constant 0 : i32
    %c0_i32_0 = arith.constant 0 : i32
    %c0_i32_1 = arith.constant 0 : i32
    return %c0_i32, %c0_i32_0 : i32, i32
  }
  func.func @transform_5(%arg0: i32, %arg1: i32) -> (i32, i32) {
    %c0_i32 = arith.constant 0 : i32
    %c0_i32_0 = arith.constant 0 : i32
    return %arg0, %c0_i32 : i32, i32
  }
}

module attributes {stable_mosaic.version = 11 : i64} {
  func.func @_ffn_kernel(%arg0: i32, %arg1: i32, %arg2: memref<16x32xf32, #tpu.memory_space<vmem>>, %arg3: memref<64x32xf32, #tpu.memory_space<vmem>>, %arg4: memref<1x64xf32, #tpu.memory_space<vmem>>, %arg5: memref<32x64xf32, #tpu.memory_space<vmem>>, %arg6: memref<1x32xf32, #tpu.memory_space<vmem>>, %arg7: memref<16x32xf32, #tpu.memory_space<vmem>>, %arg8: memref<16x32xf32, #tpu.memory_space<vmem>>) attributes {dimension_semantics = [#tpu.dimension_semantics<parallel>, #tpu.dimension_semantics<arbitrary>], iteration_bounds = array<i64: 1, 1>, scalar_prefetch = 0 : i64, scratch_operands = 1 : i64, tpu.core_type = #tpu.core_type<tc>, window_params = [{transform_indices = @transform_0, window_bounds = array<i64: 16, 32>}, {pipeline_mode = #tpu.pipeline_mode<synchronous>, transform_indices = @transform_1, window_bounds = array<i64: 64, 32>}, {pipeline_mode = #tpu.pipeline_mode<synchronous>, transform_indices = @transform_2, window_bounds = array<i64: 1, 64>}, {pipeline_mode = #tpu.pipeline_mode<synchronous>, transform_indices = @transform_3, window_bounds = array<i64: 32, 64>}, {pipeline_mode = #tpu.pipeline_mode<synchronous>, transform_indices = @transform_4, window_bounds = array<i64: 1, 32>}, {transform_indices = @transform_5, window_bounds = array<i64: 16, 32>}]} {
    %c0_i32 = arith.constant 0 : i32
    %0 = arith.cmpi eq, %arg1, %c0_i32 : i32
    %1 = arith.extui %0 : i1 to i32
    %c0_i32_0 = arith.constant 0 : i32
    %2 = arith.cmpi ne, %1, %c0_i32_0 : i32
    scf.if %2 {
      %cst_18 = arith.constant 0.000000e+00 : f32
      %25 = vector.broadcast %cst_18 : f32 to vector<16x32xf32>
      %c0_19 = arith.constant 0 : index
      %c0_20 = arith.constant 0 : index
      %26 = vector.load %arg8[%c0_19, %c0_20] : memref<16x32xf32, #tpu.memory_space<vmem>>, vector<16x32xf32>
      tpu.vector_store %arg8[%c0_19, %c0_20], %25 {strides = array<i32>} : memref<16x32xf32, #tpu.memory_space<vmem>>, vector<16x32xf32>,
    } else {
    }
    %c0 = arith.constant 0 : index
    %c0_1 = arith.constant 0 : index
    %3 = vector.load %arg2[%c0, %c0_1] : memref<16x32xf32, #tpu.memory_space<vmem>>, vector<16x32xf32>
    %c0_2 = arith.constant 0 : index
    %c0_3 = arith.constant 0 : index
    %4 = vector.load %arg3[%c0_2, %c0_3] : memref<64x32xf32, #tpu.memory_space<vmem>>, vector<64x32xf32>
    %cst = arith.constant dense<0.000000e+00> : vector<16x64xf32>
    %5 = tpu.matmul %3, %4, %cst {dimension_numbers = #tpu.dot_dimension_numbers<[1], [1], [0], [0], [0, 0, 1, 0], [], []>} : vector<16x32xf32>, vector<64x32xf32>, vector<16x64xf32> -> vector<16x64xf32>
    %c0_4 = arith.constant 0 : index
    %c0_5 = arith.constant 0 : index
    %6 = vector.load %arg4[%c0_4, %c0_5] : memref<1x64xf32, #tpu.memory_space<vmem>>, vector<1x64xf32>
    %7 = vector.broadcast %6 : vector<1x64xf32> to vector<16x64xf32>
    %8 = arith.addf %5, %7 : vector<16x64xf32>
    %cst_6 = arith.constant 5.000000e-01 : f32
    %9 = vector.broadcast %cst_6 : f32 to vector<16x64xf32>
    %10 = arith.mulf %9, %8 : vector<16x64xf32>
    %cst_7 = arith.constant 0.707106769 : f32
    %11 = vector.broadcast %cst_7 : f32 to vector<16x64xf32>
    %12 = arith.mulf %8, %11 : vector<16x64xf32>
    %13 = math.erf %12 : vector<16x64xf32>
    %cst_8 = arith.constant 1.000000e+00 : f32
    %14 = vector.broadcast %cst_8 : f32 to vector<16x64xf32>
    %15 = arith.addf %14, %13 : vector<16x64xf32>
    %16 = arith.mulf %10, %15 : vector<16x64xf32>
    %c0_9 = arith.constant 0 : index
    %c0_10 = arith.constant 0 : index
    %17 = vector.load %arg8[%c0_9, %c0_10] : memref<16x32xf32, #tpu.memory_space<vmem>>, vector<16x32xf32>
    %c0_11 = arith.constant 0 : index
    %c0_12 = arith.constant 0 : index
    %18 = vector.load %arg5[%c0_11, %c0_12] : memref<32x64xf32, #tpu.memory_space<vmem>>, vector<32x64xf32>
    %cst_13 = arith.constant dense<0.000000e+00> : vector<16x32xf32>
    %19 = tpu.matmul %16, %18, %cst_13 {dimension_numbers = #tpu.dot_dimension_numbers<[1], [1], [0], [0], [0, 0, 1, 0], [], []>} : vector<16x64xf32>, vector<32x64xf32>, vector<16x32xf32> -> vector<16x32xf32>
    %20 = arith.addf %17, %19 : vector<16x32xf32>
    %c0_14 = arith.constant 0 : index
    %c0_15 = arith.constant 0 : index
    %21 = vector.load %arg8[%c0_14, %c0_15] : memref<16x32xf32, #tpu.memory_space<vmem>>, vector<16x32xf32>
    tpu.vector_store %arg8[%c0_14, %c0_15], %20 {strides = array<i32>} : memref<16x32xf32, #tpu.memory_space<vmem>>, vector<16x32xf32>,
    %c0_i32_16 = arith.constant 0 : i32
    %22 = arith.cmpi eq, %arg1, %c0_i32_16 : i32
    %23 = arith.extui %22 : i1 to i32
    %c0_i32_17 = arith.constant 0 : i32
    %24 = arith.cmpi ne, %23, %c0_i32_17 : i32
    scf.if %24 {
      %c0_18 = arith.constant 0 : index
      %c0_19 = arith.constant 0 : index
      %25 = vector.load %arg8[%c0_18, %c0_19] : memref<16x32xf32, #tpu.memory_space<vmem>>, vector<16x32xf32>
      %c0_20 = arith.constant 0 : index
      %c0_21 = arith.constant 0 : index
      %26 = vector.load %arg6[%c0_20, %c0_21] : memref<1x32xf32, #tpu.memory_space<vmem>>, vector<1x32xf32>
      %27 = vector.broadcast %26 : vector<1x32xf32> to vector<16x32xf32>
      %28 = arith.addf %25, %27 : vector<16x32xf32>
      %c0_22 = arith.constant 0 : index
      %c0_23 = arith.constant 0 : index
      %29 = vector.load %arg7[%c0_22, %c0_23] : memref<16x32xf32, #tpu.memory_space<vmem>>, vector<16x32xf32>
      tpu.vector_store %arg7[%c0_22, %c0_23], %28 {strides = array<i32>} : memref<16x32xf32, #tpu.memory_space<vmem>>, vector<16x32xf32>,
    } else {
    }
    return
  }
  func.func @transform_0(%arg0: i32, %arg1: i32) -> (i32, i32) {
    %c0_i32 = arith.constant 0 : i32
    %c0_i32_0 = arith.constant 0 : i32
    return %arg0, %c0_i32 : i32, i32
  }
  func.func @transform_1(%arg0: i32, %arg1: i32) -> (i32, i32) {
    %c0_i32 = arith.constant 0 : i32
    %c0_i32_0 = arith.constant 0 : i32
    %c0_i32_1 = arith.constant 0 : i32
    return %c0_i32, %c0_i32_0 : i32, i32
  }
  func.func @transform_2(%arg0: i32, %arg1: i32) -> (i32, i32) {
    %c0_i32 = arith.constant 0 : i32
    %c0_i32_0 = arith.constant 0 : i32
    %c0_i32_1 = arith.constant 0 : i32
    return %c0_i32, %c0_i32_0 : i32, i32
  }
  func.func @transform_3(%arg0: i32, %arg1: i32) -> (i32, i32) {
    %c0_i32 = arith.constant 0 : i32
    %c0_i32_0 = arith.constant 0 : i32
    %c0_i32_1 = arith.constant 0 : i32
    return %c0_i32, %c0_i32_0 : i32, i32
  }
  func.func @transform_4(%arg0: i32, %arg1: i32) -> (i32, i32) {
    %c0_i32 = arith.constant 0 : i32
    %c0_i32_0 = arith.constant 0 : i32
    %c0_i32_1 = arith.constant 0 : i32
    return %c0_i32, %c0_i32_0 : i32, i32
  }
  func.func @transform_5(%arg0: i32, %arg1: i32) -> (i32, i32) {
    %c0_i32 = arith.constant 0 : i32
    %c0_i32_0 = arith.constant 0 : i32
    return %arg0, %c0_i32 : i32, i32
  }
}

</mosaic_0001>

<llo_original>
// kernel: tpu_custom_call.1
$region0: #{tpu_custom_call.1}
  #allocation0 [shape = 'u32[]', space=smem, size = 0x4, offset = 0x4, fixed_abs, tag = 'smem constant byte address 0x4 - core index']
  #allocation1 [shape = 'u32[144,128]{1,0:T(1,128)}', space=vmem, size = 0x12000, scoped, tag = 'internal scratch']
  #allocation2 [shape = 'f32[16,32]{1,0:T(8,128)}', space=vmem, size = 0x2000, scoped, tag = 'scratch operand']
  %s0 = inlined_call_operand.vmem [shape: f32[16,32], index: 0, kind: input, shape index: {}]
  %s1 = inlined_call_operand.vmem [shape: f32[64,32], index: 1, kind: input, shape index: {}]
  %s2 = inlined_call_operand.vmem [shape: f32[1,64], index: 2, kind: input, shape index: {}]
  %s3 = inlined_call_operand.vmem [shape: f32[32,64], index: 3, kind: input, shape index: {}]
  %s4 = inlined_call_operand.vmem [shape: f32[1,32], index: 4, kind: input, shape index: {}]
  %s5 = inlined_call_operand.hbm [shape: f32[16,32], index: 5, kind: output, shape index: {}]
  %s6 = sld [smem:[#allocation0]]
  $region38: #{tpu_custom_call.1} parent=0
    _
  %s8 = ssub.s32 1, %s6
  %s9 = scalar_select 0, %s8, %s6
  $region1: #{tpu_custom_call.1} parent=0
    #allocation3 [shape = 'u8[8192]{0}', space=vmem, size = 0x2000, scoped, tag = 'output window, operand 0, single buffered']
    #allocation4 [shape = 's32[1]{0}', space=sflag, size = 0x4, scoped, tag = 'scoped memory for tpu_custom_call.1']
    %10 = vsyncpa [#allocation4], 0
    // Predicated region
    $region2: #{tpu_custom_call.1} parent=1 // pred_check
      _
    $region3: #{tpu_custom_call.1} parent=1 // pred_check_branch
      %12 = sbr.rel (0) target = $region5
    $region4: #{tpu_custom_call.1} parent=1 // pred_region
      _
    $region5: #{tpu_custom_call.1} parent=1 // pred_fallthru
      _
    // Predicated region
    $region6: #{tpu_custom_call.1} parent=1 // pred_check
      _
    $region7: #{tpu_custom_call.1} parent=1 // pred_check_branch
      %14 = sbr.rel (0) target = $region9
    $region8: #{tpu_custom_call.1} parent=1 // pred_region
      _
    $region9: #{tpu_custom_call.1} parent=1 // pred_fallthru
      _
    // Predicated region
    $region10: #{tpu_custom_call.1} parent=1 // pred_check
      _
    $region11: #{tpu_custom_call.1} parent=1 // pred_check_branch
      %16 = sbr.rel (0) target = $region13
    $region12: #{tpu_custom_call.1} parent=1 // pred_region
      _
    $region13: #{tpu_custom_call.1} parent=1 // pred_fallthru
      _
    // Predicated region
    $region14: #{tpu_custom_call.1} parent=1 // pred_check
      _
    $region15: #{tpu_custom_call.1} parent=1 // pred_check_branch
      %18 = sbr.rel (0) target = $region17
    $region16: #{tpu_custom_call.1} parent=1 // pred_region
      _
    $region17: #{tpu_custom_call.1} parent=1 // pred_fallthru
      _
    // Predicated region
    $region18: #{tpu_custom_call.1} parent=1 // pred_check
      _
    $region19: #{tpu_custom_call.1} parent=1 // pred_check_branch
      %20 = sbr.rel (0) target = $region21
    $region20: #{tpu_custom_call.1} parent=1 // pred_region
      _
    $region21: #{tpu_custom_call.1} parent=1 // pred_fallthru
      _
    %p21 = scmp.eq.s32.totalorder 0, 0
    // Predicated region
    $region22: #{tpu_custom_call.1} parent=1 // pred_check
      %p22 = pneg %p21
    $region23: #{tpu_custom_call.1} parent=1 // pred_check_branch
      %24 = sbr.rel (%p22) target = $region25
    $region24: #{tpu_custom_call.1} parent=1 // pred_region
      %vm25 = vcmask 261120
      %26 = vst.msk [vmem:[#allocation2] sm:$0xff] %vm25, 0.0
      %27 = vst.msk [vmem:[#allocation2 + $0x8] sm:$0xff] %vm25, 0.0
    $region25: #{tpu_custom_call.1} parent=1 // pred_fallthru
      _
    %v28 = vld [vmem:[%s0] sm:$0xff]
    %v29 = vld [vmem:[%s0 + $0x8] sm:$0xff]
    %v30 = vld [vmem:[%s1] sm:$0xff]
    %v31 = vld [vmem:[%s1 + $0x8] sm:$0xff]
    %v32 = vld [vmem:[%s1 + $0x10] sm:$0xff]
    %v33 = vld [vmem:[%s1 + $0x18] sm:$0xff]
    %v34 = vld [vmem:[%s1 + $0x20] sm:$0xff]
    %v35 = vld [vmem:[%s1 + $0x28] sm:$0xff]
    %v36 = vld [vmem:[%s1 + $0x30] sm:$0xff]
    %v37 = vld [vmem:[%s1 + $0x38] sm:$0xff]
    %v38 = vld [vmem:[%s2] sm:$0x1]
    %v40 = vlaneseq
    %v41 = vshrl.u32 %v40, 7
    %v42 = vsub.s32 0, %v41
    %v43 = vrot.slane %v38, %v42
    %vm45 = vcmask 261120
    %v47 = vsel %vm45, %v28, 0
    %v50 = vsel %vm45, %v29, 0
    %v53 = vsel %vm45, %v30, 0
    %v56 = vsel %vm45, %v31, 0
    %v59 = vsel %vm45, %v32, 0
    %v62 = vsel %vm45, %v33, 0
    %v65 = vsel %vm45, %v34, 0
    %v68 = vsel %vm45, %v35, 0
    %v71 = vsel %vm45, %v36, 0
    %v74 = vsel %vm45, %v37, 0
    %76 = vmatprep.subr.mxu0 0.0
    %77 = vmatpush1.xpose.msra.mxu0 0.0
    %78 = vmatprep.subr.mxu0 0.0
    %79 = vmatpush1.xpose.msra.mxu0 0.0
    %80 = vmatprep.subr.mxu0 0.0
    %81 = vmatpush1.xpose.msra.mxu0 0.0
    %82 = vmatprep.subr.mxu0 0.0
    %83 = vmatpush1.xpose.msra.mxu0 0.0
    %84 = vmatprep.subr.mxu0 0.0
    %85 = vmatpush1.xpose.msra.mxu0 0.0
    %86 = vmatprep.subr.mxu0 0.0
    %87 = vmatpush1.xpose.msra.mxu0 0.0
    %88 = vmatprep.subr.mxu0 0.0
    %89 = vmatpush1.xpose.msra.mxu0 0.0
    %90 = vmatprep.subr.mxu0 0.0
    %91 = vmatpush1.xpose.msra.mxu0 0.0
    %92 = vmatprep.subr.mxu0 0.0
    %93 = vmatpush1.xpose.msra.mxu0 %v74
    %94 = vmatprep.subr.mxu0 0.0
    %95 = vmatpush1.xpose.msra.mxu0 %v71
    %96 = vmatprep.subr.mxu0 0.0
    %97 = vmatpush1.xpose.msra.mxu0 %v68
    %98 = vmatprep.subr.mxu0 0.0
    %99 = vmatpush1.xpose.msra.mxu0 %v65
    %100 = vmatprep.subr.mxu0 0.0
    %101 = vmatpush1.xpose.msra.mxu0 %v62
    %102 = vmatprep.subr.mxu0 0.0
    %103 = vmatpush1.xpose.msra.mxu0 %v59
    %104 = vmatprep.subr.mxu0 0.0
    %105 = vmatpush1.xpose.msra.mxu0 %v56
    %106 = vmatprep.subr.mxu0 0.0
    %107 = vmatpush1.xpose.msra.mxu0 %v53
    %108 = vmatprep.subr.mxu0 0.0
    %109 = vmatpush2.xpose.msra.mxu0 0.0
    %110 = vmatprep.subr.mxu0 0.0
    %111 = vmatpush2.xpose.msra.mxu0 0.0
    %112 = vmatprep.subr.mxu0 0.0
    %113 = vmatpush2.xpose.msra.mxu0 0.0
    %114 = vmatprep.subr.mxu0 0.0
    %115 = vmatpush2.xpose.msra.mxu0 0.0
    %116 = vmatprep.subr.mxu0 0.0
    %117 = vmatpush2.xpose.msra.mxu0 0.0
    %118 = vmatprep.subr.mxu0 0.0
    %119 = vmatpush2.xpose.msra.mxu0 0.0
    %120 = vmatprep.subr.mxu0 0.0
    %121 = vmatpush2.xpose.msra.mxu0 0.0
    %122 = vmatprep.subr.mxu0 0.0
    %123 = vmatpush2.xpose.msra.mxu0 0.0
    %124 = vmatprep.subr.mxu0 0.0
    %125 = vmatpush2.xpose.msra.mxu0 0.0
    %126 = vmatprep.subr.mxu0 0.0
    %127 = vmatpush2.xpose.msra.mxu0 0.0
    %128 = vmatprep.subr.mxu0 0.0
    %129 = vmatpush2.xpose.msra.mxu0 0.0
    %130 = vmatprep.subr.mxu0 0.0
    %131 = vmatpush2.xpose.msra.mxu0 0.0
    %132 = vmatprep.subr.mxu0 0.0
    %133 = vmatpush2.xpose.msra.mxu0 0.0
    %134 = vmatprep.subr.mxu0 0.0
    %135 = vmatpush2.xpose.msra.mxu0 0.0
    %136 = vmatprep.subr.mxu0 0.0
    %137 = vmatpush2.xpose.msra.mxu0 0.0
    %138 = vmatprep.subr.mxu0 0.0
    %139 = vmatpush2.xpose.msra.mxu0 0.0
    %140 = vmatprep.mubr.f32.mxu0 0.0
    %141 = vmatmul.mubr.f32.gmra.mxu0 %v47
    %v142 = vpop.f32.mrf.mxu0
    %v143 = vadd.f32 %v43, %v142
    %v144 = vpop.f32.mrf.mxu0
    %145 = vmatprep.mubr.f32.mxu0 0.0
    %146 = vmatmul.mubr.f32.gmra.mxu0 %v50
    %v147 = vpop.f32.mrf.mxu0
    %v148 = vadd.f32 %v43, %v147
    %v149 = vpop.f32.mrf.mxu0
    %150 = vdwg.mxu0
    %v151 = vmul.f32 %v143, 0.5
    %v152 = vmul.f32 %v148, 0.5
    %v153 = vmul.f32 %v143, 0.70710677
    %v154 = vmul.f32 %v148, 0.70710677
    %v155 = verf.f32.pop %v153
    %v156 = verf.f32.pop %v154
    %v157 = vadd.f32 %v155, 1.0
    %v158 = vadd.f32 %v156, 1.0
    %v159 = vmul.f32 %v151, %v157
    %v160 = vmul.f32 %v152, %v158
    %v161 = vld [vmem:[#allocation2] sm:$0xff]
    %v162 = vld [vmem:[#allocation2 + $0x8] sm:$0xff]
    %v163 = vld [vmem:[%s3] sm:$0xff]
    %v164 = vld [vmem:[%s3 + $0x8] sm:$0xff]
    %v165 = vld [vmem:[%s3 + $0x10] sm:$0xff]
    %v166 = vld [vmem:[%s3 + $0x18] sm:$0xff]
    %vm167 = vcmask 523264
    %v169 = vsel %vm167, %v159, 0
    %v172 = vsel %vm167, %v160, 0
    %v175 = vsel %vm167, %v163, 0
    %v178 = vsel %vm167, %v164, 0
    %v181 = vsel %vm167, %v165, 0
    %v184 = vsel %vm167, %v166, 0
    %186 = vmatprep.subr.mxu0 0.0
    %187 = vmatpush1.xpose.msra.mxu0 0.0
    %188 = vmatprep.subr.mxu0 0.0
    %189 = vmatpush1.xpose.msra.mxu0 0.0
    %190 = vmatprep.subr.mxu0 0.0
    %191 = vmatpush1.xpose.msra.mxu0 0.0
    %192 = vmatprep.subr.mxu0 0.0
    %193 = vmatpush1.xpose.msra.mxu0 0.0
    %194 = vmatprep.subr.mxu0 0.0
    %195 = vmatpush1.xpose.msra.mxu0 0.0
    %196 = vmatprep.subr.mxu0 0.0
    %197 = vmatpush1.xpose.msra.mxu0 0.0
    %198 = vmatprep.subr.mxu0 0.0
    %199 = vmatpush1.xpose.msra.mxu0 0.0
    %200 = vmatprep.subr.mxu0 0.0
    %201 = vmatpush1.xpose.msra.mxu0 0.0
    %202 = vmatprep.subr.mxu0 0.0
    %203 = vmatpush1.xpose.msra.mxu0 0.0
    %204 = vmatprep.subr.mxu0 0.0
    %205 = vmatpush1.xpose.msra.mxu0 0.0
    %206 = vmatprep.subr.mxu0 0.0
    %207 = vmatpush1.xpose.msra.mxu0 0.0
    %208 = vmatprep.subr.mxu0 0.0
    %209 = vmatpush1.xpose.msra.mxu0 0.0
    %210 = vmatprep.subr.mxu0 0.0
    %211 = vmatpush1.xpose.msra.mxu0 %v184
    %212 = vmatprep.subr.mxu0 0.0
    %213 = vmatpush1.xpose.msra.mxu0 %v181
    %214 = vmatprep.subr.mxu0 0.0
    %215 = vmatpush1.xpose.msra.mxu0 %v178
    %216 = vmatprep.subr.mxu0 0.0
    %217 = vmatpush1.xpose.msra.mxu0 %v175
    %218 = vmatprep.subr.mxu0 0.0
    %219 = vmatpush2.xpose.msra.mxu0 0.0
    %220 = vmatprep.subr.mxu0 0.0
    %221 = vmatpush2.xpose.msra.mxu0 0.0
    %222 = vmatprep.subr.mxu0 0.0
    %223 = vmatpush2.xpose.msra.mxu0 0.0
    %224 = vmatprep.subr.mxu0 0.0
    %225 = vmatpush2.xpose.msra.mxu0 0.0
    %226 = vmatprep.subr.mxu0 0.0
    %227 = vmatpush2.xpose.msra.mxu0 0.0
    %228 = vmatprep.subr.mxu0 0.0
    %229 = vmatpush2.xpose.msra.mxu0 0.0
    %230 = vmatprep.subr.mxu0 0.0
    %231 = vmatpush2.xpose.msra.mxu0 0.0
    %232 = vmatprep.subr.mxu0 0.0
    %233 = vmatpush2.xpose.msra.mxu0 0.0
    %234 = vmatprep.subr.mxu0 0.0
    %235 = vmatpush2.xpose.msra.mxu0 0.0
    %236 = vmatprep.subr.mxu0 0.0
    %237 = vmatpush2.xpose.msra.mxu0 0.0
    %238 = vmatprep.subr.mxu0 0.0
    %239 = vmatpush2.xpose.msra.mxu0 0.0
    %240 = vmatprep.subr.mxu0 0.0
    %241 = vmatpush2.xpose.msra.mxu0 0.0
    %242 = vmatprep.subr.mxu0 0.0
    %243 = vmatpush2.xpose.msra.mxu0 0.0
    %244 = vmatprep.subr.mxu0 0.0
    %245 = vmatpush2.xpose.msra.mxu0 0.0
    %246 = vmatprep.subr.mxu0 0.0
    %247 = vmatpush2.xpose.msra.mxu0 0.0
    %248 = vmatprep.subr.mxu0 0.0
    %249 = vmatpush2.xpose.msra.mxu0 0.0
    %250 = vmatprep.mubr.f32.mxu0 0.0
    %251 = vmatmul.mubr.f32.gmra.mxu0 %v169
    %v252 = vpop.f32.mrf.mxu0
    %v253 = vadd.f32 0.0, %v252
    %v254 = vpop.f32.mrf.mxu0
    %255 = vmatprep.mubr.f32.mxu0 0.0
    %256 = vmatmul.mubr.f32.gmra.mxu0 %v172
    %v257 = vpop.f32.mrf.mxu0
    %v258 = vadd.f32 0.0, %v257
    %v259 = vpop.f32.mrf.mxu0
    %260 = vdwg.mxu0
    %v261 = vadd.f32 %v161, %v253
    %v262 = vadd.f32 %v162, %v258
    %263 = vst.msk [vmem:[#allocation2] sm:$0xff] %vm45, %v261
    %264 = vst.msk [vmem:[#allocation2 + $0x8] sm:$0xff] %vm45, %v262
    // Predicated region
    $region26: #{tpu_custom_call.1} parent=1 // pred_check
      %p265 = pneg %p21
    $region27: #{tpu_custom_call.1} parent=1 // pred_check_branch
      %267 = sbr.rel (%p265) target = $region29
    $region28: #{tpu_custom_call.1} parent=1 // pred_region
      %v268 = vld [vmem:[#allocation2] sm:$0xff]
      %v269 = vld [vmem:[#allocation2 + $0x8] sm:$0xff]
      %v270 = vld [vmem:[%s4] sm:$0x1]
      %v272 = vlaneseq
      %v273 = vshrl.u32 %v272, 7
      %v274 = vsub.s32 0, %v273
      %v275 = vrot.slane %v270, %v274
      %v277 = vadd.f32 %v268, %v275
      %v278 = vadd.f32 %v269, %v275
      %279 = vst.msk [vmem:[#allocation3] sm:$0xff] %vm45, %v277
      %280 = vst.msk [vmem:[#allocation3 + $0x8] sm:$0xff] %vm45, %v278
    $region29: #{tpu_custom_call.1} parent=1 // pred_fallthru
      _
    // Predicated region
    $region30: #{tpu_custom_call.1} parent=1 // pred_check
      _
    $region31: #{tpu_custom_call.1} parent=1 // pred_check_branch
      %282 = sbr.rel (0) target = $region33
    $region32: #{tpu_custom_call.1} parent=1 // pred_region
      %s284 = ssub.s32 256, 256
      %285 = vsyncadd [#allocation4], %s284
      %s286 = sshll.u32 [#allocation3], 4
      %s287 = int_to_ptr.vmem [resolvable:$true] %s286
      %292 = dma.vmem_to_hbm [thread:$0]  %s287, 256, %s5, [#allocation4], 128, 128, 8
    $region33: #{tpu_custom_call.1} parent=1 // pred_fallthru
      _
    // Predicated region
    $region34: #{tpu_custom_call.1} parent=1 // pred_check
      _
    $region35: #{tpu_custom_call.1} parent=1 // pred_check_branch
      %294 = sbr.rel (0) target = $region37
    $region36: #{tpu_custom_call.1} parent=1 // pred_region
      %295 = dma.done [#allocation4], 256
    $region37: #{tpu_custom_call.1} parent=1 // pred_fallthru
      _
    %296 = vsyncpa [#allocation4], 1

// kernel: tpu_custom_call.1
$region0: #{tpu_custom_call.1}
  #allocation0 [shape = 'u32[]', space=smem, size = 0x4, offset = 0x4, fixed_abs, tag = 'smem constant byte address 0x4 - core index']
  #allocation1 [shape = 'u32[144,128]{1,0:T(1,128)}', space=vmem, size = 0x12000, scoped, tag = 'internal scratch']
  #allocation2 [shape = 'f32[16,32]{1,0:T(8,128)}', space=vmem, size = 0x2000, scoped, tag = 'scratch operand']
  %s0 = inlined_call_operand.vmem [shape: f32[16,32], index: 0, kind: input, shape index: {}]
  %s1 = inlined_call_operand.vmem [shape: f32[64,32], index: 1, kind: input, shape index: {}]
  %s2 = inlined_call_operand.vmem [shape: f32[1,64], index: 2, kind: input, shape index: {}]
  %s3 = inlined_call_operand.vmem [shape: f32[32,64], index: 3, kind: input, shape index: {}]
  %s4 = inlined_call_operand.vmem [shape: f32[1,32], index: 4, kind: input, shape index: {}]
  %s5 = inlined_call_operand.hbm [shape: f32[16,32], index: 5, kind: output, shape index: {}]
  %s6 = sld [smem:[#allocation0]]
  $region38: #{tpu_custom_call.1} parent=0
    _
  %s8 = ssub.s32 1, %s6
  %s9 = scalar_select 0, %s8, %s6
  $region1: #{tpu_custom_call.1} parent=0
    #allocation3 [shape = 'u8[8192]{0}', space=vmem, size = 0x2000, scoped, tag = 'output window, operand 0, single buffered']
    #allocation4 [shape = 's32[1]{0}', space=sflag, size = 0x4, scoped, tag = 'scoped memory for tpu_custom_call.1']
    %10 = vsyncpa [#allocation4], 0
    // Predicated region
    $region2: #{tpu_custom_call.1} parent=1 // pred_check
      _
    $region3: #{tpu_custom_call.1} parent=1 // pred_check_branch
      %12 = sbr.rel (0) target = $region5
    $region4: #{tpu_custom_call.1} parent=1 // pred_region
      _
    $region5: #{tpu_custom_call.1} parent=1 // pred_fallthru
      _
    // Predicated region
    $region6: #{tpu_custom_call.1} parent=1 // pred_check
      _
    $region7: #{tpu_custom_call.1} parent=1 // pred_check_branch
      %14 = sbr.rel (0) target = $region9
    $region8: #{tpu_custom_call.1} parent=1 // pred_region
      _
    $region9: #{tpu_custom_call.1} parent=1 // pred_fallthru
      _
    // Predicated region
    $region10: #{tpu_custom_call.1} parent=1 // pred_check
      _
    $region11: #{tpu_custom_call.1} parent=1 // pred_check_branch
      %16 = sbr.rel (0) target = $region13
    $region12: #{tpu_custom_call.1} parent=1 // pred_region
      _
    $region13: #{tpu_custom_call.1} parent=1 // pred_fallthru
      _
    // Predicated region
    $region14: #{tpu_custom_call.1} parent=1 // pred_check
      _
    $region15: #{tpu_custom_call.1} parent=1 // pred_check_branch
      %18 = sbr.rel (0) target = $region17
    $region16: #{tpu_custom_call.1} parent=1 // pred_region
      _
    $region17: #{tpu_custom_call.1} parent=1 // pred_fallthru
      _
    // Predicated region
    $region18: #{tpu_custom_call.1} parent=1 // pred_check
      _
    $region19: #{tpu_custom_call.1} parent=1 // pred_check_branch
      %20 = sbr.rel (0) target = $region21
    $region20: #{tpu_custom_call.1} parent=1 // pred_region
      _
    $region21: #{tpu_custom_call.1} parent=1 // pred_fallthru
      _
    %p21 = scmp.eq.s32.totalorder 0, 0
    // Predicated region
    $region22: #{tpu_custom_call.1} parent=1 // pred_check
      %p22 = pneg %p21
    $region23: #{tpu_custom_call.1} parent=1 // pred_check_branch
      %24 = sbr.rel (%p22) target = $region25
    $region24: #{tpu_custom_call.1} parent=1 // pred_region
      %vm25 = vcmask 261120
      %26 = vst.msk [vmem:[#allocation2] sm:$0xff] %vm25, 0.0
      %27 = vst.msk [vmem:[#allocation2 + $0x8] sm:$0xff] %vm25, 0.0
    $region25: #{tpu_custom_call.1} parent=1 // pred_fallthru
      _
    %v28 = vld [vmem:[%s0] sm:$0xff]
    %v29 = vld [vmem:[%s0 + $0x8] sm:$0xff]
    %v30 = vld [vmem:[%s1] sm:$0xff]
    %v31 = vld [vmem:[%s1 + $0x8] sm:$0xff]
    %v32 = vld [vmem:[%s1 + $0x10] sm:$0xff]
    %v33 = vld [vmem:[%s1 + $0x18] sm:$0xff]
    %v34 = vld [vmem:[%s1 + $0x20] sm:$0xff]
    %v35 = vld [vmem:[%s1 + $0x28] sm:$0xff]
    %v36 = vld [vmem:[%s1 + $0x30] sm:$0xff]
    %v37 = vld [vmem:[%s1 + $0x38] sm:$0xff]
    %v38 = vld [vmem:[%s2] sm:$0x1]
    %v40 = vlaneseq
    %v41 = vshrl.u32 %v40, 7
    %v42 = vsub.s32 0, %v41
    %v43 = vrot.slane %v38, %v42
    %vm45 = vcmask 261120
    %v47 = vsel %vm45, %v28, 0
    %v50 = vsel %vm45, %v29, 0
    %v53 = vsel %vm45, %v30, 0
    %v56 = vsel %vm45, %v31, 0
    %v59 = vsel %vm45, %v32, 0
    %v62 = vsel %vm45, %v33, 0
    %v65 = vsel %vm45, %v34, 0
    %v68 = vsel %vm45, %v35, 0
    %v71 = vsel %vm45, %v36, 0
    %v74 = vsel %vm45, %v37, 0
    %76 = vmatprep.subr.mxu0 0.0
    %77 = vmatpush1.xpose.msra.mxu0 0.0
    %78 = vmatprep.subr.mxu0 0.0
    %79 = vmatpush1.xpose.msra.mxu0 0.0
    %80 = vmatprep.subr.mxu0 0.0
    %81 = vmatpush1.xpose.msra.mxu0 0.0
    %82 = vmatprep.subr.mxu0 0.0
    %83 = vmatpush1.xpose.msra.mxu0 0.0
    %84 = vmatprep.subr.mxu0 0.0
    %85 = vmatpush1.xpose.msra.mxu0 0.0
    %86 = vmatprep.subr.mxu0 0.0
    %87 = vmatpush1.xpose.msra.mxu0 0.0
    %88 = vmatprep.subr.mxu0 0.0
    %89 = vmatpush1.xpose.msra.mxu0 0.0
    %90 = vmatprep.subr.mxu0 0.0
    %91 = vmatpush1.xpose.msra.mxu0 0.0
    %92 = vmatprep.subr.mxu0 0.0
    %93 = vmatpush1.xpose.msra.mxu0 %v74
    %94 = vmatprep.subr.mxu0 0.0
    %95 = vmatpush1.xpose.msra.mxu0 %v71
    %96 = vmatprep.subr.mxu0 0.0
    %97 = vmatpush1.xpose.msra.mxu0 %v68
    %98 = vmatprep.subr.mxu0 0.0
    %99 = vmatpush1.xpose.msra.mxu0 %v65
    %100 = vmatprep.subr.mxu0 0.0
    %101 = vmatpush1.xpose.msra.mxu0 %v62
    %102 = vmatprep.subr.mxu0 0.0
    %103 = vmatpush1.xpose.msra.mxu0 %v59
    %104 = vmatprep.subr.mxu0 0.0
    %105 = vmatpush1.xpose.msra.mxu0 %v56
    %106 = vmatprep.subr.mxu0 0.0
    %107 = vmatpush1.xpose.msra.mxu0 %v53
    %108 = vmatprep.subr.mxu0 0.0
    %109 = vmatpush2.xpose.msra.mxu0 0.0
    %110 = vmatprep.subr.mxu0 0.0
    %111 = vmatpush2.xpose.msra.mxu0 0.0
    %112 = vmatprep.subr.mxu0 0.0
    %113 = vmatpush2.xpose.msra.mxu0 0.0
    %114 = vmatprep.subr.mxu0 0.0
    %115 = vmatpush2.xpose.msra.mxu0 0.0
    %116 = vmatprep.subr.mxu0 0.0
    %117 = vmatpush2.xpose.msra.mxu0 0.0
    %118 = vmatprep.subr.mxu0 0.0
    %119 = vmatpush2.xpose.msra.mxu0 0.0
    %120 = vmatprep.subr.mxu0 0.0
    %121 = vmatpush2.xpose.msra.mxu0 0.0
    %122 = vmatprep.subr.mxu0 0.0
    %123 = vmatpush2.xpose.msra.mxu0 0.0
    %124 = vmatprep.subr.mxu0 0.0
    %125 = vmatpush2.xpose.msra.mxu0 0.0
    %126 = vmatprep.subr.mxu0 0.0
    %127 = vmatpush2.xpose.msra.mxu0 0.0
    %128 = vmatprep.subr.mxu0 0.0
    %129 = vmatpush2.xpose.msra.mxu0 0.0
    %130 = vmatprep.subr.mxu0 0.0
    %131 = vmatpush2.xpose.msra.mxu0 0.0
    %132 = vmatprep.subr.mxu0 0.0
    %133 = vmatpush2.xpose.msra.mxu0 0.0
    %134 = vmatprep.subr.mxu0 0.0
    %135 = vmatpush2.xpose.msra.mxu0 0.0
    %136 = vmatprep.subr.mxu0 0.0
    %137 = vmatpush2.xpose.msra.mxu0 0.0
    %138 = vmatprep.subr.mxu0 0.0
    %139 = vmatpush2.xpose.msra.mxu0 0.0
    %140 = vmatprep.mubr.f32.mxu0 0.0
    %141 = vmatmul.mubr.f32.gmra.mxu0 %v47
    %v142 = vpop.f32.mrf.mxu0
    %v143 = vadd.f32 %v43, %v142
    %v144 = vpop.f32.mrf.mxu0
    %145 = vmatprep.mubr.f32.mxu0 0.0
    %146 = vmatmul.mubr.f32.gmra.mxu0 %v50
    %v147 = vpop.f32.mrf.mxu0
    %v148 = vadd.f32 %v43, %v147
    %v149 = vpop.f32.mrf.mxu0
    %150 = vdwg.mxu0
    %v151 = vmul.f32 %v143, 0.5
    %v152 = vmul.f32 %v148, 0.5
    %v153 = vmul.f32 %v143, 0.70710677
    %v154 = vmul.f32 %v148, 0.70710677
    %v155 = verf.f32.pop %v153
    %v156 = verf.f32.pop %v154
    %v157 = vadd.f32 %v155, 1.0
    %v158 = vadd.f32 %v156, 1.0
    %v159 = vmul.f32 %v151, %v157
    %v160 = vmul.f32 %v152, %v158
    %v161 = vld [vmem:[#allocation2] sm:$0xff]
    %v162 = vld [vmem:[#allocation2 + $0x8] sm:$0xff]
    %v163 = vld [vmem:[%s3] sm:$0xff]
    %v164 = vld [vmem:[%s3 + $0x8] sm:$0xff]
    %v165 = vld [vmem:[%s3 + $0x10] sm:$0xff]
    %v166 = vld [vmem:[%s3 + $0x18] sm:$0xff]
    %vm167 = vcmask 523264
    %v169 = vsel %vm167, %v159, 0
    %v172 = vsel %vm167, %v160, 0
    %v175 = vsel %vm167, %v163, 0
    %v178 = vsel %vm167, %v164, 0
    %v181 = vsel %vm167, %v165, 0
    %v184 = vsel %vm167, %v166, 0
    %186 = vmatprep.subr.mxu0 0.0
    %187 = vmatpush1.xpose.msra.mxu0 0.0
    %188 = vmatprep.subr.mxu0 0.0
    %189 = vmatpush1.xpose.msra.mxu0 0.0
    %190 = vmatprep.subr.mxu0 0.0
    %191 = vmatpush1.xpose.msra.mxu0 0.0
    %192 = vmatprep.subr.mxu0 0.0
    %193 = vmatpush1.xpose.msra.mxu0 0.0
    %194 = vmatprep.subr.mxu0 0.0
    %195 = vmatpush1.xpose.msra.mxu0 0.0
    %196 = vmatprep.subr.mxu0 0.0
    %197 = vmatpush1.xpose.msra.mxu0 0.0
    %198 = vmatprep.subr.mxu0 0.0
    %199 = vmatpush1.xpose.msra.mxu0 0.0
    %200 = vmatprep.subr.mxu0 0.0
    %201 = vmatpush1.xpose.msra.mxu0 0.0
    %202 = vmatprep.subr.mxu0 0.0
    %203 = vmatpush1.xpose.msra.mxu0 0.0
    %204 = vmatprep.subr.mxu0 0.0
    %205 = vmatpush1.xpose.msra.mxu0 0.0
    %206 = vmatprep.subr.mxu0 0.0
    %207 = vmatpush1.xpose.msra.mxu0 0.0
    %208 = vmatprep.subr.mxu0 0.0
    %209 = vmatpush1.xpose.msra.mxu0 0.0
    %210 = vmatprep.subr.mxu0 0.0
    %211 = vmatpush1.xpose.msra.mxu0 %v184
    %212 = vmatprep.subr.mxu0 0.0
    %213 = vmatpush1.xpose.msra.mxu0 %v181
    %214 = vmatprep.subr.mxu0 0.0
    %215 = vmatpush1.xpose.msra.mxu0 %v178
    %216 = vmatprep.subr.mxu0 0.0
    %217 = vmatpush1.xpose.msra.mxu0 %v175
    %218 = vmatprep.subr.mxu0 0.0
    %219 = vmatpush2.xpose.msra.mxu0 0.0
    %220 = vmatprep.subr.mxu0 0.0
    %221 = vmatpush2.xpose.msra.mxu0 0.0
    %222 = vmatprep.subr.mxu0 0.0
    %223 = vmatpush2.xpose.msra.mxu0 0.0
    %224 = vmatprep.subr.mxu0 0.0
    %225 = vmatpush2.xpose.msra.mxu0 0.0
    %226 = vmatprep.subr.mxu0 0.0
    %227 = vmatpush2.xpose.msra.mxu0 0.0
    %228 = vmatprep.subr.mxu0 0.0
    %229 = vmatpush2.xpose.msra.mxu0 0.0
    %230 = vmatprep.subr.mxu0 0.0
    %231 = vmatpush2.xpose.msra.mxu0 0.0
    %232 = vmatprep.subr.mxu0 0.0
    %233 = vmatpush2.xpose.msra.mxu0 0.0
    %234 = vmatprep.subr.mxu0 0.0
    %235 = vmatpush2.xpose.msra.mxu0 0.0
    %236 = vmatprep.subr.mxu0 0.0
    %237 = vmatpush2.xpose.msra.mxu0 0.0
    %238 = vmatprep.subr.mxu0 0.0
    %239 = vmatpush2.xpose.msra.mxu0 0.0
    %240 = vmatprep.subr.mxu0 0.0
    %241 = vmatpush2.xpose.msra.mxu0 0.0
    %242 = vmatprep.subr.mxu0 0.0
    %243 = vmatpush2.xpose.msra.mxu0 0.0
    %244 = vmatprep.subr.mxu0 0.0
    %245 = vmatpush2.xpose.msra.mxu0 0.0
    %246 = vmatprep.subr.mxu0 0.0
    %247 = vmatpush2.xpose.msra.mxu0 0.0
    %248 = vmatprep.subr.mxu0 0.0
    %249 = vmatpush2.xpose.msra.mxu0 0.0
    %250 = vmatprep.mubr.f32.mxu0 0.0
    %251 = vmatmul.mubr.f32.gmra.mxu0 %v169
    %v252 = vpop.f32.mrf.mxu0
    %v253 = vadd.f32 0.0, %v252
    %v254 = vpop.f32.mrf.mxu0
    %255 = vmatprep.mubr.f32.mxu0 0.0
    %256 = vmatmul.mubr.f32.gmra.mxu0 %v172
    %v257 = vpop.f32.mrf.mxu0
    %v258 = vadd.f32 0.0, %v257
    %v259 = vpop.f32.mrf.mxu0
    %260 = vdwg.mxu0
    %v261 = vadd.f32 %v161, %v253
    %v262 = vadd.f32 %v162, %v258
    %263 = vst.msk [vmem:[#allocation2] sm:$0xff] %vm45, %v261
    %264 = vst.msk [vmem:[#allocation2 + $0x8] sm:$0xff] %vm45, %v262
    // Predicated region
    $region26: #{tpu_custom_call.1} parent=1 // pred_check
      %p265 = pneg %p21
    $region27: #{tpu_custom_call.1} parent=1 // pred_check_branch
      %267 = sbr.rel (%p265) target = $region29
    $region28: #{tpu_custom_call.1} parent=1 // pred_region
      %v268 = vld [vmem:[#allocation2] sm:$0xff]
      %v269 = vld [vmem:[#allocation2 + $0x8] sm:$0xff]
      %v270 = vld [vmem:[%s4] sm:$0x1]
      %v272 = vlaneseq
      %v273 = vshrl.u32 %v272, 7
      %v274 = vsub.s32 0, %v273
      %v275 = vrot.slane %v270, %v274
      %v277 = vadd.f32 %v268, %v275
      %v278 = vadd.f32 %v269, %v275
      %279 = vst.msk [vmem:[#allocation3] sm:$0xff] %vm45, %v277
      %280 = vst.msk [vmem:[#allocation3 + $0x8] sm:$0xff] %vm45, %v278
    $region29: #{tpu_custom_call.1} parent=1 // pred_fallthru
      _
    // Predicated region
    $region30: #{tpu_custom_call.1} parent=1 // pred_check
      _
    $region31: #{tpu_custom_call.1} parent=1 // pred_check_branch
      %282 = sbr.rel (0) target = $region33
    $region32: #{tpu_custom_call.1} parent=1 // pred_region
      %s284 = ssub.s32 256, 256
      %285 = vsyncadd [#allocation4], %s284
      %s286 = sshll.u32 [#allocation3], 4
      %s287 = int_to_ptr.vmem [resolvable:$true] %s286
      %292 = dma.vmem_to_hbm [thread:$0]  %s287, 256, %s5, [#allocation4], 128, 128, 8
    $region33: #{tpu_custom_call.1} parent=1 // pred_fallthru
      _
    // Predicated region
    $region34: #{tpu_custom_call.1} parent=1 // pred_check
      _
    $region35: #{tpu_custom_call.1} parent=1 // pred_check_branch
      %294 = sbr.rel (0) target = $region37
    $region36: #{tpu_custom_call.1} parent=1 // pred_region
      %295 = dma.done [#allocation4], 256
    $region37: #{tpu_custom_call.1} parent=1 // pred_fallthru
      _
    %296 = vsyncpa [#allocation4], 1

</llo_original>
